<compile_context>
chip_gen: v6e
topology: v6e:2x2x1
jax: 0.10.0
libtpu: 0.0.40
codegen_flags: <defaults>
</compile_context>

<pallas_src>
import functools

import jax
import jax.numpy as jnp
from jax.experimental import pallas as pl
from jax.experimental.pallas import tpu as pltpu

BN_EPS = 1e-5
KP = 128          # K-padded input-feature width (hidden_dim + num_logits -> 128)
HP = 128          # lane-padded hidden width
NP = 128          # lane-padded fc3 output width (slab column count)
P_ROWS = 8        # sublane-padded count of small per-feature parameter rows

# Row offsets inside the single packed parameter slab.
_W1_OFF = 0
_W2_OFF = _W1_OFF + KP
_W3_OFF = _W2_OFF + HP
_P_OFF = _W3_OFF + HP
SLAB_ROWS = _P_OFF + P_ROWS          # 392


def _discriminator_kernel(x_ref, params_ref, out_ref, *, batch, num_devices):
    x = x_ref[...]                                     # (B, KP), zero-padded cols
    w1 = params_ref[_W1_OFF:_W1_OFF + KP, :]           # (KP, HP)  tile-aligned slice
    w2 = params_ref[_W2_OFF:_W2_OFF + HP, :]           # (HP, HP)
    w3 = params_ref[_W3_OFF:_W3_OFF + HP, :]           # (HP, NP)
    g1 = params_ref[_P_OFF + 0:_P_OFF + 1, :]          # (1, HP) gamma1 (pad=1)
    be1 = params_ref[_P_OFF + 1:_P_OFF + 2, :]         # (1, HP) beta1  (pad=0)
    g2 = params_ref[_P_OFF + 2:_P_OFF + 3, :]          # (1, HP) gamma2 (pad=1)
    be2 = params_ref[_P_OFF + 3:_P_OFF + 4, :]         # (1, HP) beta2  (pad=0)
    b3 = params_ref[_P_OFF + 4:_P_OFF + 5, :]          # (1, NP) fc3 bias (pad=0)

    inv_b = jnp.float32(1.0 / batch)                   # compile-time constant

    def bn_relu(h, gamma, beta):
        # Training-mode BatchNorm1d folded with ReLU.  Centered (two-pass)
        # variance: at these shapes h is a single vreg, so the extra pass is
        # free and avoids E[h^2]-mean^2 cancellation for arbitrary weights.
        mean = jnp.sum(h, axis=0, keepdims=True) * inv_b        # (1, HP)
        d = h - mean
        var = jnp.sum(d * d, axis=0, keepdims=True) * inv_b     # biased var
        scale = gamma * jax.lax.rsqrt(var + BN_EPS)             # EUP rsqrt
        return jnp.maximum(d * scale + beta, 0.0)               # padded lanes stay 0

    # fc1 (+bn1+relu): fc1 bias omitted — (xW + b) - mean(xW + b) == xW - mean(xW)
    h = jnp.dot(x, w1, preferred_element_type=jnp.float32)      # (B, HP)
    h = bn_relu(h, g1, be1)
    # fc2 (+bn2+relu): fc2 bias omitted for the same reason
    h = jnp.dot(h, w2, preferred_element_type=jnp.float32)      # (B, HP)
    h = bn_relu(h, g2, be2)
    # fc3 (bias kept); write only the real logits (one masked vst on one vreg)
    z = jnp.dot(h, w3, preferred_element_type=jnp.float32) + b3  # (B, NP)
    out_ref[...] = z[:, :num_devices].astype(out_ref.dtype)


def discriminator_forward(x, param_slab, num_devices):
    """x: (batch, hidden_dim + num_logits) f32 -> (batch, num_devices) f32."""
    batch, in_dim = x.shape
    # Lane-pad x once so the kernel sees a lane-dense (B, 128) tile; the padded
    # columns multiply w1's zero rows, so they contribute exactly nothing.
    x_p = jnp.pad(x, ((0, 0), (0, KP - in_dim)))

    vmem = pl.BlockSpec(memory_space=pltpu.MemorySpace.VMEM)
    kernel = functools.partial(
        _discriminator_kernel, batch=batch, num_devices=num_devices)

    cost = pl.CostEstimate(
        flops=2 * batch * (KP * HP + HP * HP + HP * NP),
        transcendentals=2 * HP,                      # two rsqrt rows
        bytes_accessed=4 * (batch * KP + SLAB_ROWS * NP + batch * num_devices),
    )

    return pl.pallas_call(
        kernel,
        out_shape=jax.ShapeDtypeStruct((batch, num_devices), jnp.float32),
        in_specs=[vmem, vmem],
        out_specs=vmem,
        cost_estimate=cost,
    )(x_p, param_slab)


def make_params(key, in_dim, hidden_dim, num_devices):
    """Deterministic synthetic parameters in 'PyTorch layout' (linears already
    transposed to (in, out); biases / BN params as (1, dim))."""
    ks = jax.random.split(key, 6)
    w1 = jax.random.normal(ks[0], (in_dim, hidden_dim), jnp.float32) * 0.1
    b1 = jax.random.normal(ks[1], (1, hidden_dim), jnp.float32) * 0.1
    w2 = jax.random.normal(ks[2], (hidden_dim, hidden_dim), jnp.float32) * 0.1
    b2 = jax.random.normal(ks[3], (1, hidden_dim), jnp.float32) * 0.1
    w3 = jax.random.normal(ks[4], (hidden_dim, num_devices), jnp.float32) * 0.1
    b3 = jax.random.normal(ks[5], (1, num_devices), jnp.float32) * 0.1
    # BatchNorm affine params: PyTorch default init (gamma=1, beta=0).
    g1 = jnp.ones((1, hidden_dim), jnp.float32)
    be1 = jnp.zeros((1, hidden_dim), jnp.float32)
    g2 = jnp.ones((1, hidden_dim), jnp.float32)
    be2 = jnp.zeros((1, hidden_dim), jnp.float32)
    return (w1, b1, g1, be1, w2, b2, g2, be2, w3, b3)


def pack_params(params, in_dim, hidden_dim, num_devices):
    """Pack ALL parameters into one flat (392, 128) f32 slab (single DMA).

    b1/b2 are intentionally dropped (exactly cancelled by BatchNorm).
    Padding invariants: weights/beta/bias padded with 0, gamma padded with 1,
    so padded lanes remain exactly zero through BN/relu/fc3.
    """
    (w1, b1, g1, be1, w2, b2, g2, be2, w3, b3) = params
    del b1, b2

    slab = jnp.zeros((SLAB_ROWS, NP), jnp.float32)
    slab = slab.at[_W1_OFF:_W1_OFF + in_dim, :hidden_dim].set(w1)
    slab = slab.at[_W2_OFF:_W2_OFF + hidden_dim, :hidden_dim].set(w2)
    slab = slab.at[_W3_OFF:_W3_OFF + hidden_dim, :num_devices].set(w3)
    slab = slab.at[_P_OFF + 0, :].set(1.0)
    slab = slab.at[_P_OFF + 0, :hidden_dim].set(g1[0])      # gamma1 (pad=1)
    slab = slab.at[_P_OFF + 1, :hidden_dim].set(be1[0])     # beta1  (pad=0)
    slab = slab.at[_P_OFF + 2, :].set(1.0)
    slab = slab.at[_P_OFF + 2, :hidden_dim].set(g2[0])      # gamma2 (pad=1)
    slab = slab.at[_P_OFF + 3, :hidden_dim].set(be2[0])     # beta2  (pad=0)
    slab = slab.at[_P_OFF + 4, :num_devices].set(b3[0])     # fc3 bias (pad=0)
    return slab


def _reference_forward(x, params):
    """Plain-JAX reference of the PyTorch forward (training-mode BN),
    including the fc1/fc2 biases that the kernel provably drops."""
    (w1, b1, g1, be1, w2, b2, g2, be2, w3, b3) = params

    def bn(h, g, be):
        m = jnp.mean(h, axis=0, keepdims=True)
        v = jnp.mean((h - m) ** 2, axis=0, keepdims=True)
        return (h - m) / jnp.sqrt(v + BN_EPS) * g + be

    h = jnp.maximum(bn(x @ w1 + b1, g1, be1), 0.0)
    h = jnp.maximum(bn(h @ w2 + b2, g2, be2), 0.0)
    return h @ w3 + b3


if __name__ == "__main__":
    # Shapes implied by the module:
    #   num_logits = args.num_classes = 4
    #   hidden_dim = args.hidden_dim  = 32
    #   NUM_DEVICES                   = 3
    #   x: (batch, hidden_dim + num_logits)
    batch = 8
    num_logits = 4
    hidden_dim = 32
    num_devices = 3
    in_dim = hidden_dim + num_logits

    key = jax.random.PRNGKey(0)
    kx, kp = jax.random.split(key)
    x = jax.random.normal(kx, (batch, in_dim), jnp.float32)
    params = make_params(kp, in_dim, hidden_dim, num_devices)
    param_slab = pack_params(params, in_dim, hidden_dim, num_devices)

    fwd = jax.jit(discriminator_forward, static_argnames=("num_devices",))
    z = fwd(x, param_slab, num_devices=num_devices)
    jax.block_until_ready(z)

    z_ref = _reference_forward(x, params)
    assert z.shape == (batch, num_devices)
    assert jnp.allclose(z, z_ref, atol=1e-4, rtol=1e-4), "mismatch vs reference"

    print("KERNEL_OK")
</pallas_src>

<mosaic_0001>
module attributes {stable_mosaic.version = 11 : i64} {
  func.func @_discriminator_kernel(%arg0: memref<8x128xf32, #tpu.memory_space<vmem>>, %arg1: memref<392x128xf32, #tpu.memory_space<vmem>>, %arg2: memref<8x3xf32, #tpu.memory_space<vmem>>) attributes {dimension_semantics = [], scalar_prefetch = 0 : i64, scratch_operands = 0 : i64, tpu.core_type = #tpu.core_type<tc>} {
    %c0 = arith.constant 0 : index
    %c0_0 = arith.constant 0 : index
    %0 = vector.load %arg0[%c0, %c0_0] : memref<8x128xf32, #tpu.memory_space<vmem>>, vector<8x128xf32>
    %c0_1 = arith.constant 0 : index
    %c0_2 = arith.constant 0 : index
    %1 = vector.load %arg1[%c0_1, %c0_2] : memref<392x128xf32, #tpu.memory_space<vmem>>, vector<128x128xf32>
    %c128 = arith.constant 128 : index
    %c0_3 = arith.constant 0 : index
    %2 = vector.load %arg1[%c128, %c0_3] : memref<392x128xf32, #tpu.memory_space<vmem>>, vector<128x128xf32>
    %c256 = arith.constant 256 : index
    %c0_4 = arith.constant 0 : index
    %3 = vector.load %arg1[%c256, %c0_4] : memref<392x128xf32, #tpu.memory_space<vmem>>, vector<128x128xf32>
    %c384 = arith.constant 384 : index
    %c0_5 = arith.constant 0 : index
    %4 = vector.load %arg1[%c384, %c0_5] : memref<392x128xf32, #tpu.memory_space<vmem>>, vector<1x128xf32>
    %c385 = arith.constant 385 : index
    %c0_6 = arith.constant 0 : index
    %5 = vector.load %arg1[%c385, %c0_6] : memref<392x128xf32, #tpu.memory_space<vmem>>, vector<1x128xf32>
    %c386 = arith.constant 386 : index
    %c0_7 = arith.constant 0 : index
    %6 = vector.load %arg1[%c386, %c0_7] : memref<392x128xf32, #tpu.memory_space<vmem>>, vector<1x128xf32>
    %c387 = arith.constant 387 : index
    %c0_8 = arith.constant 0 : index
    %7 = vector.load %arg1[%c387, %c0_8] : memref<392x128xf32, #tpu.memory_space<vmem>>, vector<1x128xf32>
    %c388 = arith.constant 388 : index
    %c0_9 = arith.constant 0 : index
    %8 = vector.load %arg1[%c388, %c0_9] : memref<392x128xf32, #tpu.memory_space<vmem>>, vector<1x128xf32>
    %cst = arith.constant dense<0.000000e+00> : vector<8x128xf32>
    %9 = tpu.matmul %0, %1, %cst {dimension_numbers = #tpu.dot_dimension_numbers<[1], [0], [0], [1], [0, 0, 1, 1], [], []>} : vector<8x128xf32>, vector<128x128xf32>, vector<8x128xf32> -> vector<8x128xf32>
    %cst_10 = arith.constant dense<0.000000e+00> : vector<128xf32>
    %10 = vector.multi_reduction <add>, %9, %cst_10 [0] : vector<8x128xf32> to vector<128xf32>
    %11 = vector.shape_cast %10 : vector<128xf32> to vector<1x128xf32>
    %cst_11 = arith.constant 1.250000e-01 : f32
    %12 = vector.broadcast %cst_11 : f32 to vector<1x128xf32>
    %13 = arith.mulf %11, %12 : vector<1x128xf32>
    %14 = vector.broadcast %13 : vector<1x128xf32> to vector<8x128xf32>
    %15 = arith.subf %9, %14 : vector<8x128xf32>
    %16 = arith.mulf %15, %15 : vector<8x128xf32>
    %cst_12 = arith.constant dense<0.000000e+00> : vector<128xf32>
    %17 = vector.multi_reduction <add>, %16, %cst_12 [0] : vector<8x128xf32> to vector<128xf32>
    %18 = vector.shape_cast %17 : vector<128xf32> to vector<1x128xf32>
    %cst_13 = arith.constant 1.250000e-01 : f32
    %19 = vector.broadcast %cst_13 : f32 to vector<1x128xf32>
    %20 = arith.mulf %18, %19 : vector<1x128xf32>
    %cst_14 = arith.constant 9.99999974E-6 : f32
    %21 = vector.broadcast %cst_14 : f32 to vector<1x128xf32>
    %22 = arith.addf %20, %21 : vector<1x128xf32>
    %23 = math.rsqrt %22 : vector<1x128xf32>
    %24 = arith.mulf %4, %23 : vector<1x128xf32>
    %25 = vector.broadcast %24 : vector<1x128xf32> to vector<8x128xf32>
    %26 = arith.mulf %15, %25 : vector<8x128xf32>
    %27 = vector.broadcast %5 : vector<1x128xf32> to vector<8x128xf32>
    %28 = arith.addf %26, %27 : vector<8x128xf32>
    %cst_15 = arith.constant 0.000000e+00 : f32
    %29 = vector.broadcast %cst_15 : f32 to vector<8x128xf32>
    %30 = arith.maximumf %28, %29 : vector<8x128xf32>
    %cst_16 = arith.constant dense<0.000000e+00> : vector<8x128xf32>
    %31 = tpu.matmul %30, %2, %cst_16 {dimension_numbers = #tpu.dot_dimension_numbers<[1], [0], [0], [1], [0, 0, 1, 1], [], []>} : vector<8x128xf32>, vector<128x128xf32>, vector<8x128xf32> -> vector<8x128xf32>
    %cst_17 = arith.constant dense<0.000000e+00> : vector<128xf32>
    %32 = vector.multi_reduction <add>, %31, %cst_17 [0] : vector<8x128xf32> to vector<128xf32>
    %33 = vector.shape_cast %32 : vector<128xf32> to vector<1x128xf32>
    %cst_18 = arith.constant 1.250000e-01 : f32
    %34 = vector.broadcast %cst_18 : f32 to vector<1x128xf32>
    %35 = arith.mulf %33, %34 : vector<1x128xf32>
    %36 = vector.broadcast %35 : vector<1x128xf32> to vector<8x128xf32>
    %37 = arith.subf %31, %36 : vector<8x128xf32>
    %38 = arith.mulf %37, %37 : vector<8x128xf32>
    %cst_19 = arith.constant dense<0.000000e+00> : vector<128xf32>
    %39 = vector.multi_reduction <add>, %38, %cst_19 [0] : vector<8x128xf32> to vector<128xf32>
    %40 = vector.shape_cast %39 : vector<128xf32> to vector<1x128xf32>
    %cst_20 = arith.constant 1.250000e-01 : f32
    %41 = vector.broadcast %cst_20 : f32 to vector<1x128xf32>
    %42 = arith.mulf %40, %41 : vector<1x128xf32>
    %cst_21 = arith.constant 9.99999974E-6 : f32
    %43 = vector.broadcast %cst_21 : f32 to vector<1x128xf32>
    %44 = arith.addf %42, %43 : vector<1x128xf32>
    %45 = math.rsqrt %44 : vector<1x128xf32>
    %46 = arith.mulf %6, %45 : vector<1x128xf32>
    %47 = vector.broadcast %46 : vector<1x128xf32> to vector<8x128xf32>
    %48 = arith.mulf %37, %47 : vector<8x128xf32>
    %49 = vector.broadcast %7 : vector<1x128xf32> to vector<8x128xf32>
    %50 = arith.addf %48, %49 : vector<8x128xf32>
    %cst_22 = arith.constant 0.000000e+00 : f32
    %51 = vector.broadcast %cst_22 : f32 to vector<8x128xf32>
    %52 = arith.maximumf %50, %51 : vector<8x128xf32>
    %cst_23 = arith.constant dense<0.000000e+00> : vector<8x128xf32>
    %53 = tpu.matmul %52, %3, %cst_23 {dimension_numbers = #tpu.dot_dimension_numbers<[1], [0], [0], [1], [0, 0, 1, 1], [], []>} : vector<8x128xf32>, vector<128x128xf32>, vector<8x128xf32> -> vector<8x128xf32>
    %54 = vector.broadcast %8 : vector<1x128xf32> to vector<8x128xf32>
    %55 = arith.addf %53, %54 : vector<8x128xf32>
    %56 = vector.extract_strided_slice %55 {offsets = [0, 0], sizes = [8, 3], strides = [1, 1]} : vector<8x128xf32> to vector<8x3xf32>
    %c0_24 = arith.constant 0 : index
    %c0_25 = arith.constant 0 : index
    %57 = vector.load %arg2[%c0_24, %c0_25] : memref<8x3xf32, #tpu.memory_space<vmem>>, vector<8x3xf32>
    tpu.vector_store %arg2[%c0_24, %c0_25], %56 {strides = array<i32>} : memref<8x3xf32, #tpu.memory_space<vmem>>, vector<8x3xf32>,
    return
  }
}

</mosaic_0001>

<llo_original>
// kernel: discriminator_forward.1
$region0: #{discriminator_forward.1}
  #allocation0 [shape = 'u32[]', space=smem, size = 0x4, offset = 0x4, fixed_abs, tag = 'smem constant byte address 0x4 - core index']
  #allocation1 [shape = 'u32[144,128]{1,0:T(1,128)}', space=vmem, size = 0x12000, scoped, tag = 'internal scratch']
  %s0 = inlined_call_operand.vmem [shape: f32[8,128], index: 0, kind: input, shape index: {}]
  %s1 = inlined_call_operand.hbm [shape: f32[392,128], index: 1, kind: input, shape index: {}]
  %s2 = inlined_call_operand.vmem [shape: f32[8,3], index: 2, kind: output, shape index: {}]
  %s3 = sld [smem:[#allocation0]]
  $region22: #{discriminator_forward.1} parent=0
    _
  %s5 = ssub.s32 1, %s3
  %s6 = scalar_select 0, %s5, %s3
  $region1: #{discriminator_forward.1} parent=0
    #allocation2 [shape = 'u8[200704]{0}', space=vmem, size = 0x31000, scoped, tag = 'input window, operand 1, single buffered']
    #allocation3 [shape = 's32[1]{0}', space=sflag, size = 0x4, scoped, tag = 'scoped memory for discriminator_forward.1']
    %7 = vsyncpa [#allocation3], 0
    // Predicated region
    $region2: #{discriminator_forward.1} parent=1 // pred_check
      _
    $region3: #{discriminator_forward.1} parent=1 // pred_check_branch
      %9 = sbr.rel (0) target = $region5
    $region4: #{discriminator_forward.1} parent=1 // pred_region
      _
    $region5: #{discriminator_forward.1} parent=1 // pred_fallthru
      _
    // Predicated region
    $region6: #{discriminator_forward.1} parent=1 // pred_check
      _
    $region7: #{discriminator_forward.1} parent=1 // pred_check_branch
      %11 = sbr.rel (0) target = $region9
    $region8: #{discriminator_forward.1} parent=1 // pred_region
      %s13 = ssub.s32 6272, 6272
      %14 = vsyncadd [#allocation3], %s13
      %s15 = sshll.u32 [#allocation2], 4
      %s16 = int_to_ptr.vmem [resolvable:$true] %s15
      %21 = dma.hbm_to_vmem [thread:$0]  %s1, 6272, %s16, [#allocation3], 128, 128, 8
    $region9: #{discriminator_forward.1} parent=1 // pred_fallthru
      _
    // Predicated region
    $region10: #{discriminator_forward.1} parent=1 // pred_check
      _
    $region11: #{discriminator_forward.1} parent=1 // pred_check_branch
      %23 = sbr.rel (0) target = $region13
    $region12: #{discriminator_forward.1} parent=1 // pred_region
      %24 = dma.done [#allocation3], 6272
    $region13: #{discriminator_forward.1} parent=1 // pred_fallthru
      _
    %v25 = vld [vmem:[%s0] sm:$0xff]
    %v26 = vld [vmem:[#allocation2] sm:$0xff]
    %v27 = vld [vmem:[#allocation2 + $0x8] sm:$0xff]
    %v28 = vld [vmem:[#allocation2 + $0x10] sm:$0xff]
    %v29 = vld [vmem:[#allocation2 + $0x18] sm:$0xff]
    %v30 = vld [vmem:[#allocation2 + $0x20] sm:$0xff]
    %v31 = vld [vmem:[#allocation2 + $0x28] sm:$0xff]
    %v32 = vld [vmem:[#allocation2 + $0x30] sm:$0xff]
    %v33 = vld [vmem:[#allocation2 + $0x38] sm:$0xff]
    %v34 = vld [vmem:[#allocation2 + $0x40] sm:$0xff]
    %v35 = vld [vmem:[#allocation2 + $0x48] sm:$0xff]
    %v36 = vld [vmem:[#allocation2 + $0x50] sm:$0xff]
    %v37 = vld [vmem:[#allocation2 + $0x58] sm:$0xff]
    %v38 = vld [vmem:[#allocation2 + $0x60] sm:$0xff]
    %v39 = vld [vmem:[#allocation2 + $0x68] sm:$0xff]
    %v40 = vld [vmem:[#allocation2 + $0x70] sm:$0xff]
    %v41 = vld [vmem:[#allocation2 + $0x78] sm:$0xff]
    %v42 = vld [vmem:[#allocation2 + $0x80] sm:$0xff]
    %v43 = vld [vmem:[#allocation2 + $0x88] sm:$0xff]
    %v44 = vld [vmem:[#allocation2 + $0x90] sm:$0xff]
    %v45 = vld [vmem:[#allocation2 + $0x98] sm:$0xff]
    %v46 = vld [vmem:[#allocation2 + $0xa0] sm:$0xff]
    %v47 = vld [vmem:[#allocation2 + $0xa8] sm:$0xff]
    %v48 = vld [vmem:[#allocation2 + $0xb0] sm:$0xff]
    %v49 = vld [vmem:[#allocation2 + $0xb8] sm:$0xff]
    %v50 = vld [vmem:[#allocation2 + $0xc0] sm:$0xff]
    %v51 = vld [vmem:[#allocation2 + $0xc8] sm:$0xff]
    %v52 = vld [vmem:[#allocation2 + $0xd0] sm:$0xff]
    %v53 = vld [vmem:[#allocation2 + $0xd8] sm:$0xff]
    %v54 = vld [vmem:[#allocation2 + $0xe0] sm:$0xff]
    %v55 = vld [vmem:[#allocation2 + $0xe8] sm:$0xff]
    %v56 = vld [vmem:[#allocation2 + $0xf0] sm:$0xff]
    %v57 = vld [vmem:[#allocation2 + $0xf8] sm:$0xff]
    %v58 = vld [vmem:[#allocation2 + $0x100] sm:$0xff]
    %v59 = vld [vmem:[#allocation2 + $0x108] sm:$0xff]
    %v60 = vld [vmem:[#allocation2 + $0x110] sm:$0xff]
    %v61 = vld [vmem:[#allocation2 + $0x118] sm:$0xff]
    %v62 = vld [vmem:[#allocation2 + $0x120] sm:$0xff]
    %v63 = vld [vmem:[#allocation2 + $0x128] sm:$0xff]
    %v64 = vld [vmem:[#allocation2 + $0x130] sm:$0xff]
    %v65 = vld [vmem:[#allocation2 + $0x138] sm:$0xff]
    %v66 = vld [vmem:[#allocation2 + $0x140] sm:$0xff]
    %v67 = vld [vmem:[#allocation2 + $0x148] sm:$0xff]
    %v68 = vld [vmem:[#allocation2 + $0x150] sm:$0xff]
    %v69 = vld [vmem:[#allocation2 + $0x158] sm:$0xff]
    %v70 = vld [vmem:[#allocation2 + $0x160] sm:$0xff]
    %v71 = vld [vmem:[#allocation2 + $0x168] sm:$0xff]
    %v72 = vld [vmem:[#allocation2 + $0x170] sm:$0xff]
    %v73 = vld [vmem:[#allocation2 + $0x178] sm:$0xff]
    %v74 = vld [vmem:[#allocation2 + $0x180] sm:$0x1]
    %v75 = vld [vmem:[#allocation2 + $0x181] sm:$0x1]
    %v76 = vld [vmem:[#allocation2 + $0x182] sm:$0x1]
    %v77 = vld [vmem:[#allocation2 + $0x183] sm:$0x1]
    %v78 = vld [vmem:[#allocation2 + $0x184] sm:$0x1]
    %79 = vmatprep.subr.mxu0 0.0
    %80 = vmatpush1.msra.mxu0 %v41
    %81 = vmatprep.subr.mxu0 0.0
    %82 = vmatpush1.msra.mxu0 %v40
    %83 = vmatprep.subr.mxu0 0.0
    %84 = vmatpush1.msra.mxu0 %v39
    %85 = vmatprep.subr.mxu0 0.0
    %86 = vmatpush1.msra.mxu0 %v38
    %87 = vmatprep.subr.mxu0 0.0
    %88 = vmatpush1.msra.mxu0 %v37
    %89 = vmatprep.subr.mxu0 0.0
    %90 = vmatpush1.msra.mxu0 %v36
    %91 = vmatprep.subr.mxu0 0.0
    %92 = vmatpush1.msra.mxu0 %v35
    %93 = vmatprep.subr.mxu0 0.0
    %94 = vmatpush1.msra.mxu0 %v34
    %95 = vmatprep.subr.mxu0 0.0
    %96 = vmatpush1.msra.mxu0 %v33
    %97 = vmatprep.subr.mxu0 0.0
    %98 = vmatpush1.msra.mxu0 %v32
    %99 = vmatprep.subr.mxu0 0.0
    %100 = vmatpush1.msra.mxu0 %v31
    %101 = vmatprep.subr.mxu0 0.0
    %102 = vmatpush1.msra.mxu0 %v30
    %103 = vmatprep.subr.mxu0 0.0
    %104 = vmatpush1.msra.mxu0 %v29
    %105 = vmatprep.subr.mxu0 0.0
    %106 = vmatpush1.msra.mxu0 %v28
    %107 = vmatprep.subr.mxu0 0.0
    %108 = vmatpush1.msra.mxu0 %v27
    %109 = vmatprep.subr.mxu0 0.0
    %110 = vmatpush1.msra.mxu0 %v26
    %111 = vmatprep.subr.mxu0 0.0
    %112 = vmatpush2.msra.mxu0 0.0
    %113 = vmatprep.subr.mxu0 0.0
    %114 = vmatpush2.msra.mxu0 0.0
    %115 = vmatprep.subr.mxu0 0.0
    %116 = vmatpush2.msra.mxu0 0.0
    %117 = vmatprep.subr.mxu0 0.0
    %118 = vmatpush2.msra.mxu0 0.0
    %119 = vmatprep.subr.mxu0 0.0
    %120 = vmatpush2.msra.mxu0 0.0
    %121 = vmatprep.subr.mxu0 0.0
    %122 = vmatpush2.msra.mxu0 0.0
    %123 = vmatprep.subr.mxu0 0.0
    %124 = vmatpush2.msra.mxu0 0.0
    %125 = vmatprep.subr.mxu0 0.0
    %126 = vmatpush2.msra.mxu0 0.0
    %127 = vmatprep.subr.mxu0 0.0
    %128 = vmatpush2.msra.mxu0 0.0
    %129 = vmatprep.subr.mxu0 0.0
    %130 = vmatpush2.msra.mxu0 0.0
    %131 = vmatprep.subr.mxu0 0.0
    %132 = vmatpush2.msra.mxu0 0.0
    %133 = vmatprep.subr.mxu0 0.0
    %134 = vmatpush2.msra.mxu0 0.0
    %135 = vmatprep.subr.mxu0 0.0
    %136 = vmatpush2.msra.mxu0 0.0
    %137 = vmatprep.subr.mxu0 0.0
    %138 = vmatpush2.msra.mxu0 0.0
    %139 = vmatprep.subr.mxu0 0.0
    %140 = vmatpush2.msra.mxu0 0.0
    %141 = vmatprep.subr.mxu0 0.0
    %142 = vmatpush2.msra.mxu0 0.0
    %143 = vmatprep.mubr.f32.mxu0 0.0
    %144 = vmatmul.mubr.f32.gmra.mxu0 %v25
    %v145 = vpop.f32.mrf.mxu0
    %v146 = vadd.f32 0.0, %v145
    %v147 = vpop.f32.mrf.mxu0
    %148 = vdwg.mxu0
    %v149 = vrot.slane %v146, 4
    %v150 = vadd.f32 %v146, %v149
    %v151 = vrot.slane %v150, 2
    %v152 = vadd.f32 %v150, %v151
    %v153 = vrot.slane %v152, 1
    %v154 = vadd.f32 %v152, %v153
    %v155 = vmul.f32 %v154, 0.125
    %v156 = vsub.f32 %v146, %v155
    %v157 = vmul.f32 %v156, %v156
    %v158 = vrot.slane %v157, 4
    %v159 = vadd.f32 %v157, %v158
    %v160 = vrot.slane %v159, 2
    %v161 = vadd.f32 %v159, %v160
    %v162 = vrot.slane %v161, 1
    %v163 = vadd.f32 %v161, %v162
    %v164 = vmul.f32 %v163, 0.125
    %v165 = vadd.f32 %v164, 1e-05
    %v166 = vrsqrt.pop %v165
    %v167 = vmul.f32 %v74, %v166
    %v168 = vlaneseq
    %v169 = vshrl.u32 %v168, 7
    %v170 = vsub.s32 0, %v169
    %v171 = vrot.slane %v167, %v170
    %v172 = vmul.f32 %v156, %v171
    %v173 = vlaneseq
    %v174 = vshrl.u32 %v173, 7
    %v175 = vsub.s32 0, %v174
    %v176 = vrot.slane %v75, %v175
    %v177 = vadd.f32 %v172, %v176
    %v178 = vmax.f32 %v177, 0.0
    %179 = vmatprep.subr.mxu0 0.0
    %180 = vmatpush1.msra.mxu0 %v57
    %181 = vmatprep.subr.mxu0 0.0
    %182 = vmatpush1.msra.mxu0 %v56
    %183 = vmatprep.subr.mxu0 0.0
    %184 = vmatpush1.msra.mxu0 %v55
    %185 = vmatprep.subr.mxu0 0.0
    %186 = vmatpush1.msra.mxu0 %v54
    %187 = vmatprep.subr.mxu0 0.0
    %188 = vmatpush1.msra.mxu0 %v53
    %189 = vmatprep.subr.mxu0 0.0
    %190 = vmatpush1.msra.mxu0 %v52
    %191 = vmatprep.subr.mxu0 0.0
    %192 = vmatpush1.msra.mxu0 %v51
    %193 = vmatprep.subr.mxu0 0.0
    %194 = vmatpush1.msra.mxu0 %v50
    %195 = vmatprep.subr.mxu0 0.0
    %196 = vmatpush1.msra.mxu0 %v49
    %197 = vmatprep.subr.mxu0 0.0
    %198 = vmatpush1.msra.mxu0 %v48
    %199 = vmatprep.subr.mxu0 0.0
    %200 = vmatpush1.msra.mxu0 %v47
    %201 = vmatprep.subr.mxu0 0.0
    %202 = vmatpush1.msra.mxu0 %v46
    %203 = vmatprep.subr.mxu0 0.0
    %204 = vmatpush1.msra.mxu0 %v45
    %205 = vmatprep.subr.mxu0 0.0
    %206 = vmatpush1.msra.mxu0 %v44
    %207 = vmatprep.subr.mxu0 0.0
    %208 = vmatpush1.msra.mxu0 %v43
    %209 = vmatprep.subr.mxu0 0.0
    %210 = vmatpush1.msra.mxu0 %v42
    %211 = vmatprep.subr.mxu0 0.0
    %212 = vmatpush2.msra.mxu0 0.0
    %213 = vmatprep.subr.mxu0 0.0
    %214 = vmatpush2.msra.mxu0 0.0
    %215 = vmatprep.subr.mxu0 0.0
    %216 = vmatpush2.msra.mxu0 0.0
    %217 = vmatprep.subr.mxu0 0.0
    %218 = vmatpush2.msra.mxu0 0.0
    %219 = vmatprep.subr.mxu0 0.0
    %220 = vmatpush2.msra.mxu0 0.0
    %221 = vmatprep.subr.mxu0 0.0
    %222 = vmatpush2.msra.mxu0 0.0
    %223 = vmatprep.subr.mxu0 0.0
    %224 = vmatpush2.msra.mxu0 0.0
    %225 = vmatprep.subr.mxu0 0.0
    %226 = vmatpush2.msra.mxu0 0.0
    %227 = vmatprep.subr.mxu0 0.0
    %228 = vmatpush2.msra.mxu0 0.0
    %229 = vmatprep.subr.mxu0 0.0
    %230 = vmatpush2.msra.mxu0 0.0
    %231 = vmatprep.subr.mxu0 0.0
    %232 = vmatpush2.msra.mxu0 0.0
    %233 = vmatprep.subr.mxu0 0.0
    %234 = vmatpush2.msra.mxu0 0.0
    %235 = vmatprep.subr.mxu0 0.0
    %236 = vmatpush2.msra.mxu0 0.0
    %237 = vmatprep.subr.mxu0 0.0
    %238 = vmatpush2.msra.mxu0 0.0
    %239 = vmatprep.subr.mxu0 0.0
    %240 = vmatpush2.msra.mxu0 0.0
    %241 = vmatprep.subr.mxu0 0.0
    %242 = vmatpush2.msra.mxu0 0.0
    %243 = vmatprep.mubr.f32.mxu0 0.0
    %244 = vmatmul.mubr.f32.gmra.mxu0 %v178
    %v245 = vpop.f32.mrf.mxu0
    %v246 = vadd.f32 0.0, %v245
    %v247 = vpop.f32.mrf.mxu0
    %248 = vdwg.mxu0
    %v249 = vrot.slane %v246, 4
    %v250 = vadd.f32 %v246, %v249
    %v251 = vrot.slane %v250, 2
    %v252 = vadd.f32 %v250, %v251
    %v253 = vrot.slane %v252, 1
    %v254 = vadd.f32 %v252, %v253
    %v255 = vmul.f32 %v254, 0.125
    %v256 = vsub.f32 %v246, %v255
    %v257 = vmul.f32 %v256, %v256
    %v258 = vrot.slane %v257, 4
    %v259 = vadd.f32 %v257, %v258
    %v260 = vrot.slane %v259, 2
    %v261 = vadd.f32 %v259, %v260
    %v262 = vrot.slane %v261, 1
    %v263 = vadd.f32 %v261, %v262
    %v264 = vmul.f32 %v263, 0.125
    %v265 = vadd.f32 %v264, 1e-05
    %v266 = vrsqrt.pop %v265
    %v267 = vmul.f32 %v76, %v266
    %v268 = vlaneseq
    %v269 = vshrl.u32 %v268, 7
    %v270 = vsub.s32 0, %v269
    %v271 = vrot.slane %v267, %v270
    %v272 = vmul.f32 %v256, %v271
    %v273 = vlaneseq
    %v274 = vshrl.u32 %v273, 7
    %v275 = vsub.s32 0, %v274
    %v276 = vrot.slane %v77, %v275
    %v277 = vadd.f32 %v272, %v276
    %v278 = vmax.f32 %v277, 0.0
    %v279 = vlaneseq
    %v280 = vshrl.u32 %v279, 7
    %v281 = vsub.s32 0, %v280
    %v282 = vrot.slane %v78, %v281
    %283 = vmatprep.subr.mxu0 0.0
    %284 = vmatpush1.msra.mxu0 %v73
    %285 = vmatprep.subr.mxu0 0.0
    %286 = vmatpush1.msra.mxu0 %v72
    %287 = vmatprep.subr.mxu0 0.0
    %288 = vmatpush1.msra.mxu0 %v71
    %289 = vmatprep.subr.mxu0 0.0
    %290 = vmatpush1.msra.mxu0 %v70
    %291 = vmatprep.subr.mxu0 0.0
    %292 = vmatpush1.msra.mxu0 %v69
    %293 = vmatprep.subr.mxu0 0.0
    %294 = vmatpush1.msra.mxu0 %v68
    %295 = vmatprep.subr.mxu0 0.0
    %296 = vmatpush1.msra.mxu0 %v67
    %297 = vmatprep.subr.mxu0 0.0
    %298 = vmatpush1.msra.mxu0 %v66
    %299 = vmatprep.subr.mxu0 0.0
    %300 = vmatpush1.msra.mxu0 %v65
    %301 = vmatprep.subr.mxu0 0.0
    %302 = vmatpush1.msra.mxu0 %v64
    %303 = vmatprep.subr.mxu0 0.0
    %304 = vmatpush1.msra.mxu0 %v63
    %305 = vmatprep.subr.mxu0 0.0
    %306 = vmatpush1.msra.mxu0 %v62
    %307 = vmatprep.subr.mxu0 0.0
    %308 = vmatpush1.msra.mxu0 %v61
    %309 = vmatprep.subr.mxu0 0.0
    %310 = vmatpush1.msra.mxu0 %v60
    %311 = vmatprep.subr.mxu0 0.0
    %312 = vmatpush1.msra.mxu0 %v59
    %313 = vmatprep.subr.mxu0 0.0
    %314 = vmatpush1.msra.mxu0 %v58
    %315 = vmatprep.subr.mxu0 0.0
    %316 = vmatpush2.msra.mxu0 0.0
    %317 = vmatprep.subr.mxu0 0.0
    %318 = vmatpush2.msra.mxu0 0.0
    %319 = vmatprep.subr.mxu0 0.0
    %320 = vmatpush2.msra.mxu0 0.0
    %321 = vmatprep.subr.mxu0 0.0
    %322 = vmatpush2.msra.mxu0 0.0
    %323 = vmatprep.subr.mxu0 0.0
    %324 = vmatpush2.msra.mxu0 0.0
    %325 = vmatprep.subr.mxu0 0.0
    %326 = vmatpush2.msra.mxu0 0.0
    %327 = vmatprep.subr.mxu0 0.0
    %328 = vmatpush2.msra.mxu0 0.0
    %329 = vmatprep.subr.mxu0 0.0
    %330 = vmatpush2.msra.mxu0 0.0
    %331 = vmatprep.subr.mxu0 0.0
    %332 = vmatpush2.msra.mxu0 0.0
    %333 = vmatprep.subr.mxu0 0.0
    %334 = vmatpush2.msra.mxu0 0.0
    %335 = vmatprep.subr.mxu0 0.0
    %336 = vmatpush2.msra.mxu0 0.0
    %337 = vmatprep.subr.mxu0 0.0
    %338 = vmatpush2.msra.mxu0 0.0
    %339 = vmatprep.subr.mxu0 0.0
    %340 = vmatpush2.msra.mxu0 0.0
    %341 = vmatprep.subr.mxu0 0.0
    %342 = vmatpush2.msra.mxu0 0.0
    %343 = vmatprep.subr.mxu0 0.0
    %344 = vmatpush2.msra.mxu0 0.0
    %345 = vmatprep.subr.mxu0 0.0
    %346 = vmatpush2.msra.mxu0 0.0
    %347 = vmatprep.mubr.f32.mxu0 0.0
    %348 = vmatmul.mubr.f32.gmra.mxu0 %v278
    %v349 = vpop.f32.mrf.mxu0
    %v350 = vadd.f32 %v282, %v349
    %v351 = vpop.f32.mrf.mxu0
    %352 = vdwg.mxu0
    %vm353 = vcmask 23552
    %354 = vst.msk [vmem:[%s2] sm:$0xff] %vm353, %v350
    // Predicated region
    $region14: #{discriminator_forward.1} parent=1 // pred_check
      _
    $region15: #{discriminator_forward.1} parent=1 // pred_check_branch
      %356 = sbr.rel (0) target = $region17
    $region16: #{discriminator_forward.1} parent=1 // pred_region
      _
    $region17: #{discriminator_forward.1} parent=1 // pred_fallthru
      _
    // Predicated region
    $region18: #{discriminator_forward.1} parent=1 // pred_check
      _
    $region19: #{discriminator_forward.1} parent=1 // pred_check_branch
      %358 = sbr.rel (0) target = $region21
    $region20: #{discriminator_forward.1} parent=1 // pred_region
      _
    $region21: #{discriminator_forward.1} parent=1 // pred_fallthru
      _
    %359 = vsyncpa [#allocation3], 1

</llo_original>
